<compile_context>
chip_gen: v7x
topology: tpu7x:2x2x1
jax: 0.10.0
libtpu: 0.0.40
codegen_flags: <defaults>
</compile_context>

<pallas_src>
import jax
import jax.numpy as jnp
from jax.experimental import pallas as pl
from jax.experimental.pallas import tpu as pltpu

_LANE = 128
_SUBLANE_BF16 = 16  # bf16 packs 2 rows per sublane -> keep batch tiles a multiple of 16


def _round_up(x, m):
    return ((x + m - 1) // m) * m


def qnetwork_kernel(x_ref, w1_ref, b1_ref, w2_ref, b2_ref, w3_ref, b3_ref, o_ref):
    # Layer 1: bf16 matmul (MXU), f32 accumulate; bias + ReLU in f32 (VPU).
    h1 = jnp.dot(x_ref[...], w1_ref[...], preferred_element_type=jnp.float32)
    h1 = jnp.maximum(h1 + b1_ref[...], 0.0)
    # Layer 2
    h2 = jnp.dot(h1.astype(jnp.bfloat16), w2_ref[...],
                 preferred_element_type=jnp.float32)
    h2 = jnp.maximum(h2 + b2_ref[...], 0.0)
    # Output layer (no activation); lane-dense (padded to 128) store.
    out = jnp.dot(h2.astype(jnp.bfloat16), w3_ref[...],
                  preferred_element_type=jnp.float32)
    o_ref[...] = (out + b3_ref[...]).astype(o_ref.dtype)


def qnetwork_forward(x, params, *, tb=1024):
    """x: [B, state_size] float32; params: dict W1,b1,W2,b2,W3,b3 (W: [in, out])."""
    B, S = x.shape
    H1 = params["W1"].shape[1]
    H2 = params["W2"].shape[1]
    A = params["W3"].shape[1]
    A_pad = _round_up(A, _LANE)  # lane-dense output block

    # Batch tile: multiple of 16 (bf16 sublane packing), capped at requested tb.
    TB = min(_round_up(tb, _SUBLANE_BF16), _round_up(B, _SUBLANE_BF16))
    B_pad = _round_up(B, TB)

    # Cast MXU operands to bf16; pad batch and the output/action lane dim.
    xb = x.astype(jnp.bfloat16)
    if B_pad != B:
        xb = jnp.pad(xb, ((0, B_pad - B), (0, 0)))
    w1 = params["W1"].astype(jnp.bfloat16)
    w2 = params["W2"].astype(jnp.bfloat16)
    w3 = jnp.pad(params["W3"], ((0, 0), (0, A_pad - A))).astype(jnp.bfloat16)
    b1 = params["b1"].astype(jnp.float32)
    b2 = params["b2"].astype(jnp.float32)
    b3 = jnp.pad(params["b3"], ((0, 0), (0, A_pad - A))).astype(jnp.float32)

    def const_spec(a):
        # Whole (tiny) array resident in VMEM; same block for every grid step.
        return pl.BlockSpec(a.shape, lambda i: (0,) * a.ndim)

    cost = pl.CostEstimate(
        flops=2 * B_pad * (S * H1 + H1 * H2 + H2 * A_pad),
        transcendentals=0,
        bytes_accessed=(xb.size * 2 + B_pad * A_pad * 4
                        + w1.size * 2 + w2.size * 2 + w3.size * 2
                        + b1.size * 4 + b2.size * 4 + b3.size * 4),
    )

    out = pl.pallas_call(
        qnetwork_kernel,
        out_shape=jax.ShapeDtypeStruct((B_pad, A_pad), jnp.float32),
        grid_spec=pltpu.PrefetchScalarGridSpec(
            num_scalar_prefetch=0,
            grid=(B_pad // TB,),
            in_specs=[
                pl.BlockSpec((TB, S), lambda i: (i, 0)),   # x: tiled over batch
                const_spec(w1), const_spec(b1),
                const_spec(w2), const_spec(b2),
                const_spec(w3), const_spec(b3),
            ],
            out_specs=pl.BlockSpec((TB, A_pad), lambda i: (i, 0)),
        ),
        compiler_params=pltpu.CompilerParams(
            dimension_semantics=("parallel",)),
        cost_estimate=cost,
    )(xb, w1, b1, w2, b2, w3, b3)

    return out[:B, :A]


def init_qnetwork_params(key, state_size, action_size, hidden_dims=(64, 32)):
    """Deterministic init mimicking nn.Linear default (U[-1/sqrt(fan_in), +])."""
    dims = [state_size] + list(hidden_dims) + [action_size]
    params = {}
    for i in range(len(dims) - 1):
        fan_in, fan_out = dims[i], dims[i + 1]
        key, kw, kb = jax.random.split(key, 3)
        bound = 1.0 / jnp.sqrt(jnp.float32(fan_in))
        # Stored as [in, out] so the kernel does x @ W (transpose of torch layout).
        params[f"W{i+1}"] = jax.random.uniform(
            kw, (fan_in, fan_out), jnp.float32, -bound, bound)
        # Bias kept 2D [1, out] for TPU-friendly layout / broadcasting.
        params[f"b{i+1}"] = jax.random.uniform(
            kb, (1, fan_out), jnp.float32, -bound, bound)
    return params


def qnetwork_reference(x, params):
    """Pure-JAX reference matching the kernel's bf16-MXU / f32-accumulate numerics."""
    h = jnp.dot(x.astype(jnp.bfloat16), params["W1"].astype(jnp.bfloat16),
                preferred_element_type=jnp.float32) + params["b1"]
    h = jnp.maximum(h, 0.0)
    h = jnp.dot(h.astype(jnp.bfloat16), params["W2"].astype(jnp.bfloat16),
                preferred_element_type=jnp.float32) + params["b2"]
    h = jnp.maximum(h, 0.0)
    return jnp.dot(h.astype(jnp.bfloat16), params["W3"].astype(jnp.bfloat16),
                   preferred_element_type=jnp.float32) + params["b3"]


if __name__ == "__main__":
    state_size, action_size = 16, 4
    hidden_dims = (64, 32)

    key = jax.random.PRNGKey(0)
    key, kx1, kx2 = jax.random.split(key, 3)
    params = init_qnetwork_params(key, state_size, action_size, hidden_dims)

    # Small batch (pads up to one 16-row tile).
    x1 = jax.random.normal(kx1, (8, state_size), jnp.float32)
    out1 = qnetwork_forward(x1, params)
    jax.block_until_ready(out1)
    ref1 = qnetwork_reference(x1, params)
    assert out1.shape == (8, action_size)
    assert jnp.allclose(out1, ref1, atol=1e-4, rtol=1e-4)

    # Non-multiple batch with a small tile to exercise the batch grid + padding path.
    x2 = jax.random.normal(kx2, (33, state_size), jnp.float32)
    out2 = qnetwork_forward(x2, params, tb=16)
    jax.block_until_ready(out2)
    ref2 = qnetwork_reference(x2, params)
    assert out2.shape == (33, action_size)
    assert jnp.allclose(out2, ref2, atol=1e-4, rtol=1e-4)

    print("KERNEL_OK")
</pallas_src>

<mosaic_0001>
module attributes {stable_mosaic.version = 11 : i64} {
  func.func @qnetwork_kernel(%arg0: i32, %arg1: memref<16x16xbf16, #tpu.memory_space<vmem>>, %arg2: memref<16x64xbf16, #tpu.memory_space<vmem>>, %arg3: memref<1x64xf32, #tpu.memory_space<vmem>>, %arg4: memref<64x32xbf16, #tpu.memory_space<vmem>>, %arg5: memref<1x32xf32, #tpu.memory_space<vmem>>, %arg6: memref<32x128xbf16, #tpu.memory_space<vmem>>, %arg7: memref<1x128xf32, #tpu.memory_space<vmem>>, %arg8: memref<16x128xf32, #tpu.memory_space<vmem>>) attributes {dimension_semantics = [#tpu.dimension_semantics<parallel>], iteration_bounds = array<i64: 1>, scalar_prefetch = 0 : i64, scratch_operands = 0 : i64, tpu.core_type = #tpu.core_type<tc>, window_params = [{transform_indices = @transform_0, window_bounds = array<i64: 16, 16>}, {pipeline_mode = #tpu.pipeline_mode<synchronous>, transform_indices = @transform_1, window_bounds = array<i64: 16, 64>}, {pipeline_mode = #tpu.pipeline_mode<synchronous>, transform_indices = @transform_2, window_bounds = array<i64: 1, 64>}, {pipeline_mode = #tpu.pipeline_mode<synchronous>, transform_indices = @transform_3, window_bounds = array<i64: 64, 32>}, {pipeline_mode = #tpu.pipeline_mode<synchronous>, transform_indices = @transform_4, window_bounds = array<i64: 1, 32>}, {pipeline_mode = #tpu.pipeline_mode<synchronous>, transform_indices = @transform_5, window_bounds = array<i64: 32, 128>}, {pipeline_mode = #tpu.pipeline_mode<synchronous>, transform_indices = @transform_6, window_bounds = array<i64: 1, 128>}, {transform_indices = @transform_7, window_bounds = array<i64: 16, 128>}]} {
    %c0 = arith.constant 0 : index
    %c0_0 = arith.constant 0 : index
    %0 = vector.load %arg1[%c0, %c0_0] : memref<16x16xbf16, #tpu.memory_space<vmem>>, vector<16x16xbf16>
    %c0_1 = arith.constant 0 : index
    %c0_2 = arith.constant 0 : index
    %1 = vector.load %arg2[%c0_1, %c0_2] : memref<16x64xbf16, #tpu.memory_space<vmem>>, vector<16x64xbf16>
    %cst = arith.constant dense<0.000000e+00> : vector<16x64xf32>
    %2 = tpu.matmul %0, %1, %cst {dimension_numbers = #tpu.dot_dimension_numbers<[1], [0], [0], [1], [0, 0, 1, 1], [], []>} : vector<16x16xbf16>, vector<16x64xbf16>, vector<16x64xf32> -> vector<16x64xf32>
    %c0_3 = arith.constant 0 : index
    %c0_4 = arith.constant 0 : index
    %3 = vector.load %arg3[%c0_3, %c0_4] : memref<1x64xf32, #tpu.memory_space<vmem>>, vector<1x64xf32>
    %4 = vector.broadcast %3 : vector<1x64xf32> to vector<16x64xf32>
    %5 = arith.addf %2, %4 : vector<16x64xf32>
    %cst_5 = arith.constant 0.000000e+00 : f32
    %6 = vector.broadcast %cst_5 : f32 to vector<16x64xf32>
    %7 = arith.maximumf %5, %6 : vector<16x64xf32>
    %8 = arith.truncf %7 : vector<16x64xf32> to vector<16x64xbf16>
    %c0_6 = arith.constant 0 : index
    %c0_7 = arith.constant 0 : index
    %9 = vector.load %arg4[%c0_6, %c0_7] : memref<64x32xbf16, #tpu.memory_space<vmem>>, vector<64x32xbf16>
    %cst_8 = arith.constant dense<0.000000e+00> : vector<16x32xf32>
    %10 = tpu.matmul %8, %9, %cst_8 {dimension_numbers = #tpu.dot_dimension_numbers<[1], [0], [0], [1], [0, 0, 1, 1], [], []>} : vector<16x64xbf16>, vector<64x32xbf16>, vector<16x32xf32> -> vector<16x32xf32>
    %c0_9 = arith.constant 0 : index
    %c0_10 = arith.constant 0 : index
    %11 = vector.load %arg5[%c0_9, %c0_10] : memref<1x32xf32, #tpu.memory_space<vmem>>, vector<1x32xf32>
    %12 = vector.broadcast %11 : vector<1x32xf32> to vector<16x32xf32>
    %13 = arith.addf %10, %12 : vector<16x32xf32>
    %cst_11 = arith.constant 0.000000e+00 : f32
    %14 = vector.broadcast %cst_11 : f32 to vector<16x32xf32>
    %15 = arith.maximumf %13, %14 : vector<16x32xf32>
    %16 = arith.truncf %15 : vector<16x32xf32> to vector<16x32xbf16>
    %c0_12 = arith.constant 0 : index
    %c0_13 = arith.constant 0 : index
    %17 = vector.load %arg6[%c0_12, %c0_13] : memref<32x128xbf16, #tpu.memory_space<vmem>>, vector<32x128xbf16>
    %cst_14 = arith.constant dense<0.000000e+00> : vector<16x128xf32>
    %18 = tpu.matmul %16, %17, %cst_14 {dimension_numbers = #tpu.dot_dimension_numbers<[1], [0], [0], [1], [0, 0, 1, 1], [], []>} : vector<16x32xbf16>, vector<32x128xbf16>, vector<16x128xf32> -> vector<16x128xf32>
    %c0_15 = arith.constant 0 : index
    %c0_16 = arith.constant 0 : index
    %19 = vector.load %arg7[%c0_15, %c0_16] : memref<1x128xf32, #tpu.memory_space<vmem>>, vector<1x128xf32>
    %20 = vector.broadcast %19 : vector<1x128xf32> to vector<16x128xf32>
    %21 = arith.addf %18, %20 : vector<16x128xf32>
    %c0_17 = arith.constant 0 : index
    %c0_18 = arith.constant 0 : index
    %22 = vector.load %arg8[%c0_17, %c0_18] : memref<16x128xf32, #tpu.memory_space<vmem>>, vector<16x128xf32>
    tpu.vector_store %arg8[%c0_17, %c0_18], %21 {strides = array<i32>} : memref<16x128xf32, #tpu.memory_space<vmem>>, vector<16x128xf32>,
    return
  }
  func.func @transform_0(%arg0: i32) -> (i32, i32) {
    %c0_i32 = arith.constant 0 : i32
    %c0_i32_0 = arith.constant 0 : i32
    return %arg0, %c0_i32 : i32, i32
  }
  func.func @transform_1(%arg0: i32) -> (i32, i32) {
    %c0_i32 = arith.constant 0 : i32
    %c0_i32_0 = arith.constant 0 : i32
    %c0_i32_1 = arith.constant 0 : i32
    return %c0_i32, %c0_i32_0 : i32, i32
  }
  func.func @transform_2(%arg0: i32) -> (i32, i32) {
    %c0_i32 = arith.constant 0 : i32
    %c0_i32_0 = arith.constant 0 : i32
    %c0_i32_1 = arith.constant 0 : i32
    return %c0_i32, %c0_i32_0 : i32, i32
  }
  func.func @transform_3(%arg0: i32) -> (i32, i32) {
    %c0_i32 = arith.constant 0 : i32
    %c0_i32_0 = arith.constant 0 : i32
    %c0_i32_1 = arith.constant 0 : i32
    return %c0_i32, %c0_i32_0 : i32, i32
  }
  func.func @transform_4(%arg0: i32) -> (i32, i32) {
    %c0_i32 = arith.constant 0 : i32
    %c0_i32_0 = arith.constant 0 : i32
    %c0_i32_1 = arith.constant 0 : i32
    return %c0_i32, %c0_i32_0 : i32, i32
  }
  func.func @transform_5(%arg0: i32) -> (i32, i32) {
    %c0_i32 = arith.constant 0 : i32
    %c0_i32_0 = arith.constant 0 : i32
    %c0_i32_1 = arith.constant 0 : i32
    return %c0_i32, %c0_i32_0 : i32, i32
  }
  func.func @transform_6(%arg0: i32) -> (i32, i32) {
    %c0_i32 = arith.constant 0 : i32
    %c0_i32_0 = arith.constant 0 : i32
    %c0_i32_1 = arith.constant 0 : i32
    return %c0_i32, %c0_i32_0 : i32, i32
  }
  func.func @transform_7(%arg0: i32) -> (i32, i32) {
    %c0_i32 = arith.constant 0 : i32
    %c0_i32_0 = arith.constant 0 : i32
    return %arg0, %c0_i32 : i32, i32
  }
}

</mosaic_0001>

<llo_original>
// kernel: tpu_custom_call.1
$region0: #{tpu_custom_call.1}
  #allocation0 [shape = 'u32[]', space=smem, size = 0x4, offset = 0x4, fixed_abs, tag = 'smem constant byte address 0x4 - core index']
  #allocation1 [shape = 'u32[144,128]{1,0:T(1,128)}', space=vmem, size = 0x12000, scoped, tag = 'internal scratch']
  %s0 = inlined_call_operand.vmem [shape: bf16[16,16], index: 0, kind: input, shape index: {}]
  %s1 = inlined_call_operand.vmem [shape: bf16[16,64], index: 1, kind: input, shape index: {}]
  %s2 = inlined_call_operand.vmem [shape: f32[1,64], index: 2, kind: input, shape index: {}]
  %s3 = inlined_call_operand.vmem [shape: bf16[64,32], index: 3, kind: input, shape index: {}]
  %s4 = inlined_call_operand.vmem [shape: f32[1,32], index: 4, kind: input, shape index: {}]
  %s5 = inlined_call_operand.vmem [shape: bf16[32,128], index: 5, kind: input, shape index: {}]
  %s6 = inlined_call_operand.vmem [shape: f32[1,128], index: 6, kind: input, shape index: {}]
  %s7 = inlined_call_operand.hbm [shape: f32[16,128], index: 7, kind: output, shape index: {}]
  %s8 = sld [smem:[#allocation0]]
  $region38: #{tpu_custom_call.1} parent=0
    _
  %s10 = ssub.s32 1, %s8
  %s11 = scalar_select 0, %s10, %s8
  $region1: #{tpu_custom_call.1} parent=0
    #allocation2 [shape = 'u8[8192]{0}', space=vmem, size = 0x2000, scoped, tag = 'output window, operand 0, single buffered']
    #allocation3 [shape = 's32[1]{0}', space=sflag, size = 0x4, scoped, tag = 'scoped memory for tpu_custom_call.1']
    %12 = vsyncpa [#allocation3], 0
    // Predicated region
    $region2: #{tpu_custom_call.1} parent=1 // pred_check
      _
    $region3: #{tpu_custom_call.1} parent=1 // pred_check_branch
      %14 = sbr.rel (0) target = $region5
    $region4: #{tpu_custom_call.1} parent=1 // pred_region
      _
    $region5: #{tpu_custom_call.1} parent=1 // pred_fallthru
      _
    // Predicated region
    $region6: #{tpu_custom_call.1} parent=1 // pred_check
      _
    $region7: #{tpu_custom_call.1} parent=1 // pred_check_branch
      %16 = sbr.rel (0) target = $region9
    $region8: #{tpu_custom_call.1} parent=1 // pred_region
      _
    $region9: #{tpu_custom_call.1} parent=1 // pred_fallthru
      _
    // Predicated region
    $region10: #{tpu_custom_call.1} parent=1 // pred_check
      _
    $region11: #{tpu_custom_call.1} parent=1 // pred_check_branch
      %18 = sbr.rel (0) target = $region13
    $region12: #{tpu_custom_call.1} parent=1 // pred_region
      _
    $region13: #{tpu_custom_call.1} parent=1 // pred_fallthru
      _
    // Predicated region
    $region14: #{tpu_custom_call.1} parent=1 // pred_check
      _
    $region15: #{tpu_custom_call.1} parent=1 // pred_check_branch
      %20 = sbr.rel (0) target = $region17
    $region16: #{tpu_custom_call.1} parent=1 // pred_region
      _
    $region17: #{tpu_custom_call.1} parent=1 // pred_fallthru
      _
    // Predicated region
    $region18: #{tpu_custom_call.1} parent=1 // pred_check
      _
    $region19: #{tpu_custom_call.1} parent=1 // pred_check_branch
      %22 = sbr.rel (0) target = $region21
    $region20: #{tpu_custom_call.1} parent=1 // pred_region
      _
    $region21: #{tpu_custom_call.1} parent=1 // pred_fallthru
      _
    // Predicated region
    $region22: #{tpu_custom_call.1} parent=1 // pred_check
      _
    $region23: #{tpu_custom_call.1} parent=1 // pred_check_branch
      %24 = sbr.rel (0) target = $region25
    $region24: #{tpu_custom_call.1} parent=1 // pred_region
      _
    $region25: #{tpu_custom_call.1} parent=1 // pred_fallthru
      _
    // Predicated region
    $region26: #{tpu_custom_call.1} parent=1 // pred_check
      _
    $region27: #{tpu_custom_call.1} parent=1 // pred_check_branch
      %26 = sbr.rel (0) target = $region29
    $region28: #{tpu_custom_call.1} parent=1 // pred_region
      _
    $region29: #{tpu_custom_call.1} parent=1 // pred_fallthru
      _
    %v28 = vld [vmem:[%s0] sm:$0xf]
    %v29 = vld [vmem:[%s0 + $0x4] sm:$0xf]
    %v30 = vld [vmem:[%s1] sm:$0xf]
    %v31 = vld [vmem:[%s1 + $0x4] sm:$0xf]
    %v32 = vld [vmem:[%s2] sm:$0x1]
    %v34 = vlaneseq
    %v35 = vshrl.u32 %v34, 7
    %v36 = vsub.s32 0, %v35
    %v37 = vrot.slane %v32, %v36
    %v41 = vunpack.c.l.b16 %v28
    %v42 = vunpack.c.l.b16 %v29
    %v43 = vpack.c.b16 %v42, %v41
    %v46 = vunpack.c.l.b16 %v30
    %v47 = vunpack.c.l.b16 %v31
    %v48 = vpack.c.b16 %v47, %v46
    %vm50 = vcmask 130048
    %v52 = vsel %vm50, %v43, 0
    %54 = vmatprep.subr.bf16.mxu0 0
    %55 = vmatpush1.bf16.msra.mxu0 %v48
    %56 = vmatprep.subr.bf16.mxu0 0
    %57 = vmatpush1.bf16.msra.mxu0 0
    %58 = vmatprep.subr.bf16.mxu0 0
    %59 = vmatpush1.bf16.msra.mxu0 0
    %60 = vmatprep.subr.bf16.mxu0 0
    %61 = vmatpush1.bf16.msra.mxu0 0
    %62 = vmatprep.subr.bf16.mxu0 0
    %63 = vmatpush1.bf16.msra.mxu0 0
    %64 = vmatprep.subr.bf16.mxu0 0
    %65 = vmatpush1.bf16.msra.mxu0 0
    %66 = vmatprep.subr.bf16.mxu0 0
    %67 = vmatpush1.bf16.msra.mxu0 0
    %68 = vmatprep.subr.bf16.mxu0 0
    %69 = vmatpush1.bf16.msra.mxu0 0
    %70 = vmatprep.subr.bf16.mxu0 0
    %71 = vmatpush1.bf16.msra.mxu0 0
    %72 = vmatprep.subr.bf16.mxu0 0
    %73 = vmatpush1.bf16.msra.mxu0 0
    %74 = vmatprep.subr.bf16.mxu0 0
    %75 = vmatpush1.bf16.msra.mxu0 0
    %76 = vmatprep.subr.bf16.mxu0 0
    %77 = vmatpush1.bf16.msra.mxu0 0
    %78 = vmatprep.subr.bf16.mxu0 0
    %79 = vmatpush1.bf16.msra.mxu0 0
    %80 = vmatprep.subr.bf16.mxu0 0
    %81 = vmatpush1.bf16.msra.mxu0 0
    %82 = vmatprep.subr.bf16.mxu0 0
    %83 = vmatpush1.bf16.msra.mxu0 0
    %84 = vmatprep.subr.bf16.mxu0 0
    %85 = vmatpush1.bf16.msra.mxu0 0
    %86 = vmatprep.mubr.bf16.mxu0 0
    %87 = vmatmul.mubr.bf16.gmra.mrb[0].mxu0 %v52
    %v88 = vpop.f32.mrb[0].mxu0
    %v89 = vadd.f32 %v37, %v88
    %v90 = vpop.f32.mrb[0].mxu0
    %v91 = vpop.f32.mrb[0].mxu0
    %v92 = vadd.f32 %v37, %v91
    %v93 = vpop.f32.mrb[0].mxu0
    %94 = vdwg.mxu0
    %v95 = vmax.f32 %v89, 0.0
    %v96 = vmax.f32 %v92, 0.0
    %v97 = vpack.c.bf16 %v96, %v95
    %v98 = vld [vmem:[%s3] sm:$0xf]
    %v99 = vld [vmem:[%s3 + $0x4] sm:$0xf]
    %v100 = vld [vmem:[%s3 + $0x8] sm:$0xf]
    %v101 = vld [vmem:[%s3 + $0xc] sm:$0xf]
    %v102 = vld [vmem:[%s3 + $0x10] sm:$0xf]
    %v103 = vld [vmem:[%s3 + $0x14] sm:$0xf]
    %v104 = vld [vmem:[%s3 + $0x18] sm:$0xf]
    %v105 = vld [vmem:[%s3 + $0x1c] sm:$0xf]
    %v106 = vld [vmem:[%s4] sm:$0x1]
    %v108 = vlaneseq
    %v109 = vshrl.u32 %v108, 7
    %v110 = vsub.s32 0, %v109
    %v111 = vrot.slane %v106, %v110
    %v121 = vunpack.c.l.b16 %v98
    %v122 = vunpack.c.l.b16 %v99
    %v123 = vunpack.c.l.b16 %v100
    %v124 = vunpack.c.l.b16 %v101
    %v125 = vunpack.c.l.b16 %v102
    %v126 = vunpack.c.l.b16 %v103
    %v127 = vunpack.c.l.b16 %v104
    %v128 = vunpack.c.l.b16 %v105
    %v129 = vpack.c.b16 %v122, %v121
    %v130 = vpack.c.b16 %v124, %v123
    %v131 = vpack.c.b16 %v126, %v125
    %v132 = vpack.c.b16 %v128, %v127
    %vm137 = vcmask 523264
    %v139 = vsel %vm137, %v97, 0
    %141 = vmatprep.subr.bf16.mxu0 0
    %142 = vmatpush1.bf16.msra.mxu0 %v129
    %143 = vmatprep.subr.bf16.mxu0 0
    %144 = vmatpush1.bf16.msra.mxu0 %v130
    %145 = vmatprep.subr.bf16.mxu0 0
    %146 = vmatpush1.bf16.msra.mxu0 %v131
    %147 = vmatprep.subr.bf16.mxu0 0
    %148 = vmatpush1.bf16.msra.mxu0 %v132
    %149 = vmatprep.subr.bf16.mxu0 0
    %150 = vmatpush1.bf16.msra.mxu0 0
    %151 = vmatprep.subr.bf16.mxu0 0
    %152 = vmatpush1.bf16.msra.mxu0 0
    %153 = vmatprep.subr.bf16.mxu0 0
    %154 = vmatpush1.bf16.msra.mxu0 0
    %155 = vmatprep.subr.bf16.mxu0 0
    %156 = vmatpush1.bf16.msra.mxu0 0
    %157 = vmatprep.subr.bf16.mxu0 0
    %158 = vmatpush1.bf16.msra.mxu0 0
    %159 = vmatprep.subr.bf16.mxu0 0
    %160 = vmatpush1.bf16.msra.mxu0 0
    %161 = vmatprep.subr.bf16.mxu0 0
    %162 = vmatpush1.bf16.msra.mxu0 0
    %163 = vmatprep.subr.bf16.mxu0 0
    %164 = vmatpush1.bf16.msra.mxu0 0
    %165 = vmatprep.subr.bf16.mxu0 0
    %166 = vmatpush1.bf16.msra.mxu0 0
    %167 = vmatprep.subr.bf16.mxu0 0
    %168 = vmatpush1.bf16.msra.mxu0 0
    %169 = vmatprep.subr.bf16.mxu0 0
    %170 = vmatpush1.bf16.msra.mxu0 0
    %171 = vmatprep.subr.bf16.mxu0 0
    %172 = vmatpush1.bf16.msra.mxu0 0
    %173 = vmatprep.mubr.bf16.mxu0 0
    %174 = vmatmul.mubr.bf16.gmra.mrb[0].mxu0 %v139
    %v175 = vpop.f32.mrb[0].mxu0
    %v176 = vadd.f32 %v111, %v175
    %v177 = vpop.f32.mrb[0].mxu0
    %v178 = vpop.f32.mrb[0].mxu0
    %v179 = vadd.f32 %v111, %v178
    %v180 = vpop.f32.mrb[0].mxu0
    %181 = vdwg.mxu0
    %v182 = vmax.f32 %v176, 0.0
    %v183 = vmax.f32 %v179, 0.0
    %v184 = vpack.c.bf16 %v183, %v182
    %v185 = vld [vmem:[%s5] sm:$0xf]
    %v186 = vld [vmem:[%s5 + $0x4] sm:$0xf]
    %v187 = vld [vmem:[%s5 + $0x8] sm:$0xf]
    %v188 = vld [vmem:[%s5 + $0xc] sm:$0xf]
    %v189 = vld [vmem:[%s6] sm:$0x1]
    %v191 = vlaneseq
    %v192 = vshrl.u32 %v191, 7
    %v193 = vsub.s32 0, %v192
    %v194 = vrot.slane %v189, %v193
    %v200 = vunpack.c.l.b16 %v185
    %v201 = vunpack.c.l.b16 %v186
    %v202 = vunpack.c.l.b16 %v187
    %v203 = vunpack.c.l.b16 %v188
    %v204 = vpack.c.b16 %v201, %v200
    %v205 = vpack.c.b16 %v203, %v202
    %vm208 = vcmask 261120
    %v210 = vsel %vm208, %v184, 0
    %212 = vmatprep.subr.bf16.mxu0 0
    %213 = vmatpush1.bf16.msra.mxu0 %v204
    %214 = vmatprep.subr.bf16.mxu0 0
    %215 = vmatpush1.bf16.msra.mxu0 %v205
    %216 = vmatprep.subr.bf16.mxu0 0
    %217 = vmatpush1.bf16.msra.mxu0 0
    %218 = vmatprep.subr.bf16.mxu0 0
    %219 = vmatpush1.bf16.msra.mxu0 0
    %220 = vmatprep.subr.bf16.mxu0 0
    %221 = vmatpush1.bf16.msra.mxu0 0
    %222 = vmatprep.subr.bf16.mxu0 0
    %223 = vmatpush1.bf16.msra.mxu0 0
    %224 = vmatprep.subr.bf16.mxu0 0
    %225 = vmatpush1.bf16.msra.mxu0 0
    %226 = vmatprep.subr.bf16.mxu0 0
    %227 = vmatpush1.bf16.msra.mxu0 0
    %228 = vmatprep.subr.bf16.mxu0 0
    %229 = vmatpush1.bf16.msra.mxu0 0
    %230 = vmatprep.subr.bf16.mxu0 0
    %231 = vmatpush1.bf16.msra.mxu0 0
    %232 = vmatprep.subr.bf16.mxu0 0
    %233 = vmatpush1.bf16.msra.mxu0 0
    %234 = vmatprep.subr.bf16.mxu0 0
    %235 = vmatpush1.bf16.msra.mxu0 0
    %236 = vmatprep.subr.bf16.mxu0 0
    %237 = vmatpush1.bf16.msra.mxu0 0
    %238 = vmatprep.subr.bf16.mxu0 0
    %239 = vmatpush1.bf16.msra.mxu0 0
    %240 = vmatprep.subr.bf16.mxu0 0
    %241 = vmatpush1.bf16.msra.mxu0 0
    %242 = vmatprep.subr.bf16.mxu0 0
    %243 = vmatpush1.bf16.msra.mxu0 0
    %244 = vmatprep.mubr.bf16.mxu0 0
    %245 = vmatmul.mubr.bf16.gmra.mrb[0].mxu0 %v210
    %v246 = vpop.f32.mrb[0].mxu0
    %v247 = vadd.f32 %v194, %v246
    %v248 = vpop.f32.mrb[0].mxu0
    %v249 = vpop.f32.mrb[0].mxu0
    %v250 = vadd.f32 %v194, %v249
    %v251 = vpop.f32.mrb[0].mxu0
    %252 = vdwg.mxu0
    %253 = vst [vmem:[#allocation2] sm:$0xff] %v247
    %254 = vst [vmem:[#allocation2 + $0x8] sm:$0xff] %v250
    // Predicated region
    $region30: #{tpu_custom_call.1} parent=1 // pred_check
      _
    $region31: #{tpu_custom_call.1} parent=1 // pred_check_branch
      %256 = sbr.rel (0) target = $region33
    $region32: #{tpu_custom_call.1} parent=1 // pred_region
      %s258 = ssub.s32 256, 256
      %259 = vsyncadd [#allocation3], %s258
      %s260 = sshll.u32 [#allocation2], 4
      %s261 = int_to_ptr.vmem [resolvable:$true] %s260
      %266 = dma.vmem_to_hbm [thread:$0]  %s261, 256, %s7, [#allocation3], 128, 128, 8
    $region33: #{tpu_custom_call.1} parent=1 // pred_fallthru
      _
    // Predicated region
    $region34: #{tpu_custom_call.1} parent=1 // pred_check
      _
    $region35: #{tpu_custom_call.1} parent=1 // pred_check_branch
      %268 = sbr.rel (0) target = $region37
    $region36: #{tpu_custom_call.1} parent=1 // pred_region
      %269 = dma.done [#allocation3], 256
    $region37: #{tpu_custom_call.1} parent=1 // pred_fallthru
      _
    %270 = vsyncpa [#allocation3], 1

</llo_original>
